<compile_context>
chip_gen: v7x
topology: tpu7x:2x2x1
jax: 0.10.0
libtpu: 0.0.40
codegen_flags: <defaults>
</compile_context>

<pallas_src>
import jax
import jax.numpy as jnp
from jax import lax
from jax.experimental import pallas as pl
from jax.experimental.pallas import tpu as pltpu


def _round_up(x: int, m: int) -> int:
    return ((x + m - 1) // m) * m


def _cdiv(a: int, b: int) -> int:
    return -(-a // b)


# VMEM budget for the token-block-proportional buffers. Kept under the default
# scoped-VMEM limit of every generation (v5e 16 MiB / v6e 32 MiB / v7x 32 MiB)
# so no vmem_limit_bytes override is required; raise both together for bigger
# blocks on v6e.
_VMEM_TOKEN_BUDGET = 12 * 1024 * 1024


def _budget_tblk(cblk: int, n_vocab: int, itemsize: int,
                 budget_bytes: int = _VMEM_TOKEN_BUDGET,
                 max_tblk: int = 8192) -> int:
    """Largest lane-dense (multiple-of-128) token block fitting the VMEM budget."""
    # Per-grid-step VMEM that scales with the token block:
    #   2 * cblk * tblk * itemsize   output block, double-buffered
    #   n_vocab * tblk * itemsize    one-hot intermediate
    #   2 * tblk * 4                 int32 index block, double-buffered
    per_tok = 2 * cblk * itemsize + n_vocab * itemsize + 2 * 4
    tblk = (budget_bytes // per_tok) // 128 * 128
    return int(max(128, min(tblk, max_tblk)))


def _onehot_lookup(idx_row, emb_t, out_dtype):
    """(tblk,) int32 indices x (cblk, N) transposed table -> (cblk, tblk)."""
    n_vocab = emb_t.shape[1]
    tblk = idx_row.shape[0]
    iota_n = lax.broadcasted_iota(jnp.int32, (n_vocab, tblk), 0)
    onehot = (iota_n == idx_row[None, :]).astype(emb_t.dtype)
    # Gather + transpose fused into one standard (M,K)x(K,N) MXU matmul.
    return lax.dot_general(
        emb_t, onehot,
        dimension_numbers=(((1,), (0,)), ((), ())),
        preferred_element_type=jnp.float32,
        precision=lax.Precision.HIGHEST,
    ).astype(out_dtype)


def _bio_emb_slab_kernel(idx_ref, emb_t_ref, out_ref):
    # idx_ref: (1, tblk) int32, emb_t_ref: (cblk, N), out_ref: (cblk, tblk)
    out_ref[...] = _onehot_lookup(idx_ref[0, :], emb_t_ref[...], out_ref.dtype)


def _bio_emb_bct_kernel(idx_ref, emb_t_ref, out_ref):
    # idx_ref: (1, 1, tblk) int32, emb_t_ref: (cblk, N), out_ref: (1, cblk, tblk)
    out_ref[0, :, :] = _onehot_lookup(idx_ref[0, 0, :], emb_t_ref[...], out_ref.dtype)


def bio_embedding(idx, emb_table):
    """idx: [B, T] int, emb_table: [num_bios, C] -> [B, C, T] == emb(x).transpose(2,1)."""
    B, T = idx.shape
    N, C = emb_table.shape
    idx = idx.astype(jnp.int32)
    itemsize = emb_table.dtype.itemsize

    # C tiling: bounds per-step VMEM independently of C and gives a second
    # 'parallel' axis for megacore sharding. Full-C block when C is small.
    C_BLK_MAX = 512
    cblk = C if C <= C_BLK_MAX else C_BLK_MAX
    c_pad = _round_up(C, cblk)
    n_c = c_pad // cblk

    # Table pre-transposed once: (C, N) so the kernel matmul needs no implicit
    # transpose before the MXU.
    # TODO(synk): for num_bios beyond ~1-2K switch the one-hot contraction to a
    # row-gather path (scalar-prefetched indices + manual row DMAs).
    emb_t = emb_table.T
    if c_pad != C:
        emb_t = jnp.pad(emb_t, ((0, c_pad - C), (0, 0)))

    # Constant table block -> single-buffer it (halves its VMEM, no re-DMA).
    table_kwargs = {"pipeline_mode": pl.Buffered(1)} if n_c == 1 else {}

    tblk_budget = _budget_tblk(cblk, N, itemsize)

    if T >= 128:
        # Production path: write the final [B, C, T] layout directly from the
        # kernel with lane-dense stores (no wrapper-side transpose).
        tblk = min(tblk_budget, _round_up(T, 128))
        t_pad = _round_up(_round_up(T, 128), tblk)
        n_t = t_pad // tblk

        idx_p = jnp.pad(idx, ((0, 0), (0, t_pad - T))).reshape(B, 1, t_pad)

        out = pl.pallas_call(
            _bio_emb_bct_kernel,
            out_shape=jax.ShapeDtypeStruct((B, c_pad, t_pad), emb_table.dtype),
            grid_spec=pltpu.PrefetchScalarGridSpec(
                num_scalar_prefetch=0,
                grid=(B, n_c, n_t),
                in_specs=[
                    pl.BlockSpec((1, 1, tblk), lambda b, c, t: (b, 0, t)),
                    pl.BlockSpec((cblk, N), lambda b, c, t: (c, 0), **table_kwargs),
                ],
                out_specs=pl.BlockSpec((1, cblk, tblk), lambda b, c, t: (b, c, t)),
            ),
            compiler_params=pltpu.CompilerParams(
                dimension_semantics=("parallel", "parallel", "parallel"),
            ),
        )(idx_p, emb_t)
        return out[:, :C, :T]

    # Tiny-T path: flatten all B*T tokens into one lane-dense row.
    n_tok = B * T
    tblk = min(tblk_budget, _round_up(n_tok, 128))
    if n_tok >= 256 and _round_up(n_tok, 128) // tblk < 2:
        # Guarantee >= 2 grid steps on the 'parallel' token axis (v7x megacore).
        tblk = _round_up(_cdiv(n_tok, 2), 128)
    L = _round_up(n_tok, tblk)
    n_t = L // tblk

    idx_flat = jnp.pad(idx.reshape(1, n_tok), ((0, 0), (0, L - n_tok)))

    out_slab = pl.pallas_call(
        _bio_emb_slab_kernel,
        out_shape=jax.ShapeDtypeStruct((c_pad, L), emb_table.dtype),
        grid_spec=pltpu.PrefetchScalarGridSpec(
            num_scalar_prefetch=0,
            grid=(n_c, n_t),
            in_specs=[
                pl.BlockSpec((1, tblk), lambda c, t: (0, t)),
                pl.BlockSpec((cblk, N), lambda c, t: (c, 0), **table_kwargs),
            ],
            out_specs=pl.BlockSpec((cblk, tblk), lambda c, t: (c, t)),
        ),
        compiler_params=pltpu.CompilerParams(
            dimension_semantics=("parallel", "parallel"),
        ),
    )(idx_flat, emb_t)

    # Cheap layout plumbing for tiny T: (C, L) -> (C, B, T) -> (B, C, T).
    out = out_slab[:C, :n_tok].reshape(C, B, T)
    return jnp.transpose(out, (1, 0, 2))


def bio_embedding_ref(idx, emb_table):
    """Pure-JAX reference: emb(x).transpose(2, 1)."""
    return jnp.transpose(emb_table[idx], (0, 2, 1))


if __name__ == "__main__":
    key = jax.random.PRNGKey(0)
    k_idx, k_emb, k_idx2 = jax.random.split(key, 3)

    # Small shapes consistent with the module: B=2, T_bio=8, num_bios=16, C=32.
    B, T, NUM_BIOS, C = 2, 8, 16, 32
    emb_table = jax.random.normal(k_emb, (NUM_BIOS, C), dtype=jnp.float32)
    idx = jax.random.randint(k_idx, (B, T), 0, NUM_BIOS, dtype=jnp.int32)

    out = jax.block_until_ready(bio_embedding(idx, emb_table))
    ref = bio_embedding_ref(idx, emb_table)
    assert out.shape == (B, C, T), out.shape
    assert jnp.allclose(out, ref, atol=1e-6, rtol=1e-6), "mismatch (tiny-T path)"

    # Also exercise the direct [B, C, T] production-layout path (T >= 128).
    T2 = 128
    idx2 = jax.random.randint(k_idx2, (B, T2), 0, NUM_BIOS, dtype=jnp.int32)
    out2 = jax.block_until_ready(bio_embedding(idx2, emb_table))
    ref2 = bio_embedding_ref(idx2, emb_table)
    assert out2.shape == (B, C, T2), out2.shape
    assert jnp.allclose(out2, ref2, atol=1e-6, rtol=1e-6), "mismatch (direct path)"

    print("KERNEL_OK")
</pallas_src>

<mosaic_0001>
module attributes {stable_mosaic.version = 11 : i64} {
  func.func @_bio_emb_slab_kernel(%arg0: i32, %arg1: i32, %arg2: memref<1x128xi32, #tpu.memory_space<vmem>>, %arg3: memref<32x16xf32, #tpu.memory_space<vmem>>, %arg4: memref<32x128xf32, #tpu.memory_space<vmem>>) attributes {dimension_semantics = [#tpu.dimension_semantics<parallel>, #tpu.dimension_semantics<parallel>], iteration_bounds = array<i64: 1, 1>, scalar_prefetch = 0 : i64, scratch_operands = 0 : i64, tpu.core_type = #tpu.core_type<tc>, window_params = [{transform_indices = @transform_0, window_bounds = array<i64: 1, 128>}, {pipeline_mode = #tpu.pipeline_mode<synchronous>, transform_indices = @transform_1, window_bounds = array<i64: 32, 16>}, {transform_indices = @transform_2, window_bounds = array<i64: 32, 128>}]} {
    %c0 = arith.constant 0 : index
    %c0_0 = arith.constant 0 : index
    %0 = vector.load %arg2[%c0, %c0_0] : memref<1x128xi32, #tpu.memory_space<vmem>>, vector<1x128xi32>
    %1 = vector.shape_cast %0 : vector<1x128xi32> to vector<128xi32>
    %c0_1 = arith.constant 0 : index
    %c0_2 = arith.constant 0 : index
    %2 = vector.load %arg3[%c0_1, %c0_2] : memref<32x16xf32, #tpu.memory_space<vmem>>, vector<32x16xf32>
    %3 = tpu.iota {dimensions = array<i32: 0>} : vector<16x128xi32>
    %4 = vector.shape_cast %1 : vector<128xi32> to vector<1x128xi32>
    %5 = vector.broadcast %4 : vector<1x128xi32> to vector<16x128xi32>
    %6 = arith.cmpi eq, %3, %5 : vector<16x128xi32>
    %7 = arith.extui %6 : vector<16x128xi1> to vector<16x128xi32>
    %8 = arith.sitofp %7 : vector<16x128xi32> to vector<16x128xf32>
    %cst = arith.constant dense<0.000000e+00> : vector<32x128xf32>
    %9 = tpu.matmul %2, %8, %cst {dimension_numbers = #tpu.dot_dimension_numbers<[1], [0], [0], [1], [0, 0, 1, 1], [], []>, precision = #tpu.contract_precision<fp32>} : vector<32x16xf32>, vector<16x128xf32>, vector<32x128xf32> -> vector<32x128xf32>
    %c0_3 = arith.constant 0 : index
    %c0_4 = arith.constant 0 : index
    %10 = vector.load %arg4[%c0_3, %c0_4] : memref<32x128xf32, #tpu.memory_space<vmem>>, vector<32x128xf32>
    tpu.vector_store %arg4[%c0_3, %c0_4], %9 {strides = array<i32>} : memref<32x128xf32, #tpu.memory_space<vmem>>, vector<32x128xf32>,
    return
  }
  func.func @transform_0(%arg0: i32, %arg1: i32) -> (i32, i32) {
    %c0_i32 = arith.constant 0 : i32
    %c0_i32_0 = arith.constant 0 : i32
    return %c0_i32, %arg1 : i32, i32
  }
  func.func @transform_1(%arg0: i32, %arg1: i32) -> (i32, i32) {
    %c0_i32 = arith.constant 0 : i32
    %c0_i32_0 = arith.constant 0 : i32
    return %arg0, %c0_i32 : i32, i32
  }
  func.func @transform_2(%arg0: i32, %arg1: i32) -> (i32, i32) {
    %c0_i32 = arith.constant 0 : i32
    return %arg0, %arg1 : i32, i32
  }
}

</mosaic_0001>

<llo_original>
// kernel: tpu_custom_call.1
$region0: #{tpu_custom_call.1}
  #allocation0 [shape = 'u32[]', space=smem, size = 0x4, offset = 0x4, fixed_abs, tag = 'smem constant byte address 0x4 - core index']
  #allocation1 [shape = 'u32[144,128]{1,0:T(1,128)}', space=vmem, size = 0x12000, scoped, tag = 'internal scratch']
  %s0 = inlined_call_operand.vmem [shape: s32[1,128], index: 0, kind: input, shape index: {}]
  %s1 = inlined_call_operand.vmem [shape: f32[32,16], index: 1, kind: input, shape index: {}]
  %s2 = inlined_call_operand.hbm [shape: f32[32,128], index: 2, kind: output, shape index: {}]
  %s3 = sld [smem:[#allocation0]]
  $region18: #{tpu_custom_call.1} parent=0
    _
  %s5 = ssub.s32 1, %s3
  %s6 = scalar_select 0, %s5, %s3
  $region1: #{tpu_custom_call.1} parent=0
    #allocation2 [shape = 'u8[16384]{0}', space=vmem, size = 0x4000, scoped, tag = 'output window, operand 0, single buffered']
    #allocation3 [shape = 's32[1]{0}', space=sflag, size = 0x4, scoped, tag = 'scoped memory for tpu_custom_call.1']
    %7 = vsyncpa [#allocation3], 0
    // Predicated region
    $region2: #{tpu_custom_call.1} parent=1 // pred_check
      _
    $region3: #{tpu_custom_call.1} parent=1 // pred_check_branch
      %9 = sbr.rel (0) target = $region5
    $region4: #{tpu_custom_call.1} parent=1 // pred_region
      _
    $region5: #{tpu_custom_call.1} parent=1 // pred_fallthru
      _
    // Predicated region
    $region6: #{tpu_custom_call.1} parent=1 // pred_check
      _
    $region7: #{tpu_custom_call.1} parent=1 // pred_check_branch
      %11 = sbr.rel (0) target = $region9
    $region8: #{tpu_custom_call.1} parent=1 // pred_region
      _
    $region9: #{tpu_custom_call.1} parent=1 // pred_fallthru
      _
    %v12 = vld [vmem:[%s0] sm:$0x1]
    %v13 = vld [vmem:[%s1] sm:$0xff]
    %v14 = vld [vmem:[%s1 + $0x8] sm:$0xff]
    %v15 = vld [vmem:[%s1 + $0x10] sm:$0xff]
    %v16 = vld [vmem:[%s1 + $0x18] sm:$0xff]
    %v17 = vlaneseq
    %v18 = vshrl.u32 %v17, 7
    %v19 = vadd.s32 %v18, 8
    %v20 = vlaneseq
    %v21 = vshrl.u32 %v20, 7
    %v22 = vsub.s32 0, %v21
    %v23 = vrot.slane %v12, %v22
    %vm24 = vcmp.eq.s32.totalorder %v18, %v23
    %vm25 = vcmp.eq.s32.totalorder %v19, %v23
    %v26 = vsel %vm24, 1, 0
    %v27 = vsel %vm25, 1, 0
    %v28 = vcvt.s32.f32 %v26
    %v29 = vcvt.s32.f32 %v27
    %vm30 = vcmask 130048
    %v32 = vsel %vm30, %v13, 0
    %v35 = vsel %vm30, %v14, 0
    %v38 = vsel %vm30, %v15, 0
    %v41 = vsel %vm30, %v16, 0
    %43 = vmatprep.subr.mxu0 0.0
    %v44 = vand.u32 %v28, 4294901760
    %45 = vmatpush1.msra.mxu0 %v44
    %46 = vmatprep.subr.mxu0 0.0
    %v47 = vand.u32 %v29, 4294901760
    %48 = vmatpush1.msra.mxu0 %v47
    %49 = vmatprep.subr.mxu0 0.0
    %50 = vmatpush1.msra.mxu0 0.0
    %51 = vmatprep.subr.mxu0 0.0
    %52 = vmatpush1.msra.mxu0 0.0
    %53 = vmatprep.subr.mxu0 0.0
    %54 = vmatpush1.msra.mxu0 0.0
    %55 = vmatprep.subr.mxu0 0.0
    %56 = vmatpush1.msra.mxu0 0.0
    %57 = vmatprep.subr.mxu0 0.0
    %58 = vmatpush1.msra.mxu0 0.0
    %59 = vmatprep.subr.mxu0 0.0
    %60 = vmatpush1.msra.mxu0 0.0
    %61 = vmatprep.subr.mxu0 0.0
    %62 = vmatpush1.msra.mxu0 0.0
    %63 = vmatprep.subr.mxu0 0.0
    %64 = vmatpush1.msra.mxu0 0.0
    %65 = vmatprep.subr.mxu0 0.0
    %66 = vmatpush1.msra.mxu0 0.0
    %67 = vmatprep.subr.mxu0 0.0
    %68 = vmatpush1.msra.mxu0 0.0
    %69 = vmatprep.subr.mxu0 0.0
    %70 = vmatpush1.msra.mxu0 0.0
    %71 = vmatprep.subr.mxu0 0.0
    %72 = vmatpush1.msra.mxu0 0.0
    %73 = vmatprep.subr.mxu0 0.0
    %74 = vmatpush1.msra.mxu0 0.0
    %75 = vmatprep.subr.mxu0 0.0
    %76 = vmatpush1.msra.mxu0 0.0
    %77 = vmatprep.subr.mxu0 0.0
    %78 = vmatpush1.msra.mxu0 0.0
    %79 = vmatprep.subr.mxu0 0.0
    %80 = vmatpush1.msra.mxu0 0.0
    %81 = vmatprep.subr.mxu0 0.0
    %82 = vmatpush1.msra.mxu0 0.0
    %83 = vmatprep.subr.mxu0 0.0
    %84 = vmatpush1.msra.mxu0 0.0
    %85 = vmatprep.subr.mxu0 0.0
    %86 = vmatpush1.msra.mxu0 0.0
    %87 = vmatprep.subr.mxu0 0.0
    %88 = vmatpush1.msra.mxu0 0.0
    %89 = vmatprep.subr.mxu0 0.0
    %90 = vmatpush1.msra.mxu0 0.0
    %91 = vmatprep.subr.mxu0 0.0
    %92 = vmatpush1.msra.mxu0 0.0
    %93 = vmatprep.subr.mxu0 0.0
    %94 = vmatpush1.msra.mxu0 0.0
    %95 = vmatprep.subr.mxu0 0.0
    %96 = vmatpush1.msra.mxu0 0.0
    %97 = vmatprep.subr.mxu0 0.0
    %98 = vmatpush1.msra.mxu0 0.0
    %99 = vmatprep.subr.mxu0 0.0
    %100 = vmatpush1.msra.mxu0 0.0
    %101 = vmatprep.subr.mxu0 0.0
    %102 = vmatpush1.msra.mxu0 0.0
    %103 = vmatprep.subr.mxu0 0.0
    %104 = vmatpush1.msra.mxu0 0.0
    %105 = vmatprep.subr.mxu0 0.0
    %106 = vmatpush1.msra.mxu0 0.0
    %107 = vmatprep.subr.mxu0 0.0
    %108 = vmatpush1.msra.mxu0 0.0
    %109 = vmatprep.mubr.f32.mxu0 0.0
    %v110 = vand.u32 %v32, 4294901760
    %v111 = vsub.f32 %v32, %v110
    %v112 = vand.u32 %v111, 4294901760
    %v113 = vsub.f32 %v111, %v112
    %v114 = vand.u32 %v113, 4294901760
    %115 = vmatmul.mubr.f32.gmra.mrb[0].mxu0 %v114
    %v116 = vpop.f32.mrb[0].mxu0
    %v117 = vadd.f32 0.0, %v116
    %v118 = vpop.f32.mrb[0].mxu0
    %119 = vmatprep.mubr.f32.mxu0 0.0
    %v120 = vand.u32 %v35, 4294901760
    %v121 = vsub.f32 %v35, %v120
    %v122 = vand.u32 %v121, 4294901760
    %v123 = vsub.f32 %v121, %v122
    %v124 = vand.u32 %v123, 4294901760
    %125 = vmatmul.mubr.f32.gmra.mrb[0].mxu0 %v124
    %v126 = vpop.f32.mrb[0].mxu0
    %v127 = vadd.f32 0.0, %v126
    %v128 = vpop.f32.mrb[0].mxu0
    %129 = vmatprep.mubr.f32.mxu0 0.0
    %v130 = vand.u32 %v38, 4294901760
    %v131 = vsub.f32 %v38, %v130
    %v132 = vand.u32 %v131, 4294901760
    %v133 = vsub.f32 %v131, %v132
    %v134 = vand.u32 %v133, 4294901760
    %135 = vmatmul.mubr.f32.gmra.mrb[0].mxu0 %v134
    %v136 = vpop.f32.mrb[0].mxu0
    %v137 = vadd.f32 0.0, %v136
    %v138 = vpop.f32.mrb[0].mxu0
    %139 = vmatprep.mubr.f32.mxu0 0.0
    %v140 = vand.u32 %v41, 4294901760
    %v141 = vsub.f32 %v41, %v140
    %v142 = vand.u32 %v141, 4294901760
    %v143 = vsub.f32 %v141, %v142
    %v144 = vand.u32 %v143, 4294901760
    %145 = vmatmul.mubr.f32.gmra.mrb[0].mxu0 %v144
    %v146 = vpop.f32.mrb[0].mxu0
    %v147 = vadd.f32 0.0, %v146
    %v148 = vpop.f32.mrb[0].mxu0
    %149 = vdwg.mxu0
    %150 = vmatprep.subr.mxu0 0.0
    %v151 = vand.u32 %v28, 4294901760
    %v152 = vsub.f32 %v28, %v151
    %v153 = vand.u32 %v152, 4294901760
    %v154 = vsub.f32 %v152, %v153
    %v155 = vand.u32 %v154, 4294901760
    %156 = vmatpush1.msra.mxu0 %v155
    %157 = vmatprep.subr.mxu0 0.0
    %v158 = vand.u32 %v29, 4294901760
    %v159 = vsub.f32 %v29, %v158
    %v160 = vand.u32 %v159, 4294901760
    %v161 = vsub.f32 %v159, %v160
    %v162 = vand.u32 %v161, 4294901760
    %163 = vmatpush1.msra.mxu0 %v162
    %164 = vmatprep.subr.mxu0 0.0
    %165 = vmatpush1.msra.mxu0 0.0
    %166 = vmatprep.subr.mxu0 0.0
    %167 = vmatpush1.msra.mxu0 0.0
    %168 = vmatprep.subr.mxu0 0.0
    %169 = vmatpush1.msra.mxu0 0.0
    %170 = vmatprep.subr.mxu0 0.0
    %171 = vmatpush1.msra.mxu0 0.0
    %172 = vmatprep.subr.mxu0 0.0
    %173 = vmatpush1.msra.mxu0 0.0
    %174 = vmatprep.subr.mxu0 0.0
    %175 = vmatpush1.msra.mxu0 0.0
    %176 = vmatprep.subr.mxu0 0.0
    %177 = vmatpush1.msra.mxu0 0.0
    %178 = vmatprep.subr.mxu0 0.0
    %179 = vmatpush1.msra.mxu0 0.0
    %180 = vmatprep.subr.mxu0 0.0
    %181 = vmatpush1.msra.mxu0 0.0
    %182 = vmatprep.subr.mxu0 0.0
    %183 = vmatpush1.msra.mxu0 0.0
    %184 = vmatprep.subr.mxu0 0.0
    %185 = vmatpush1.msra.mxu0 0.0
    %186 = vmatprep.subr.mxu0 0.0
    %187 = vmatpush1.msra.mxu0 0.0
    %188 = vmatprep.subr.mxu0 0.0
    %189 = vmatpush1.msra.mxu0 0.0
    %190 = vmatprep.subr.mxu0 0.0
    %191 = vmatpush1.msra.mxu0 0.0
    %192 = vmatprep.subr.mxu0 0.0
    %193 = vmatpush1.msra.mxu0 0.0
    %194 = vmatprep.subr.mxu0 0.0
    %195 = vmatpush1.msra.mxu0 0.0
    %196 = vmatprep.subr.mxu0 0.0
    %197 = vmatpush1.msra.mxu0 0.0
    %198 = vmatprep.subr.mxu0 0.0
    %199 = vmatpush1.msra.mxu0 0.0
    %200 = vmatprep.subr.mxu0 0.0
    %201 = vmatpush1.msra.mxu0 0.0
    %202 = vmatprep.subr.mxu0 0.0
    %203 = vmatpush1.msra.mxu0 0.0
    %204 = vmatprep.subr.mxu0 0.0
    %205 = vmatpush1.msra.mxu0 0.0
    %206 = vmatprep.subr.mxu0 0.0
    %207 = vmatpush1.msra.mxu0 0.0
    %208 = vmatprep.subr.mxu0 0.0
    %209 = vmatpush1.msra.mxu0 0.0
    %210 = vmatprep.subr.mxu0 0.0
    %211 = vmatpush1.msra.mxu0 0.0
    %212 = vmatprep.subr.mxu0 0.0
    %213 = vmatpush1.msra.mxu0 0.0
    %214 = vmatprep.subr.mxu0 0.0
    %215 = vmatpush1.msra.mxu0 0.0
    %216 = vmatprep.subr.mxu0 0.0
    %217 = vmatpush1.msra.mxu0 0.0
    %218 = vmatprep.subr.mxu0 0.0
    %219 = vmatpush1.msra.mxu0 0.0
    %220 = vmatprep.subr.mxu0 0.0
    %221 = vmatpush1.msra.mxu0 0.0
    %222 = vmatprep.subr.mxu0 0.0
    %223 = vmatpush1.msra.mxu0 0.0
    %224 = vmatprep.mubr.f32.mxu0 0.0
    %v225 = vand.u32 %v32, 4294901760
    %226 = vmatmul.mubr.f32.gmra.mrb[0].mxu0 %v225
    %v227 = vpop.f32.mrb[0].mxu0
    %v228 = vadd.f32 %v117, %v227
    %v229 = vpop.f32.mrb[0].mxu0
    %230 = vmatprep.mubr.f32.mxu0 0.0
    %v231 = vand.u32 %v35, 4294901760
    %232 = vmatmul.mubr.f32.gmra.mrb[0].mxu0 %v231
    %v233 = vpop.f32.mrb[0].mxu0
    %v234 = vadd.f32 %v127, %v233
    %v235 = vpop.f32.mrb[0].mxu0
    %236 = vmatprep.mubr.f32.mxu0 0.0
    %v237 = vand.u32 %v38, 4294901760
    %238 = vmatmul.mubr.f32.gmra.mrb[0].mxu0 %v237
    %v239 = vpop.f32.mrb[0].mxu0
    %v240 = vadd.f32 %v137, %v239
    %v241 = vpop.f32.mrb[0].mxu0
    %242 = vmatprep.mubr.f32.mxu0 0.0
    %v243 = vand.u32 %v41, 4294901760
    %244 = vmatmul.mubr.f32.gmra.mrb[0].mxu0 %v243
    %v245 = vpop.f32.mrb[0].mxu0
    %v246 = vadd.f32 %v147, %v245
    %v247 = vpop.f32.mrb[0].mxu0
    %248 = vdwg.mxu0
    %249 = vmatprep.subr.mxu0 0.0
    %v250 = vand.u32 %v28, 4294901760
    %v251 = vsub.f32 %v28, %v250
    %252 = vmatpush1.msra.mxu0 %v251
    %253 = vmatprep.subr.mxu0 0.0
    %v254 = vand.u32 %v29, 4294901760
    %v255 = vsub.f32 %v29, %v254
    %256 = vmatpush1.msra.mxu0 %v255
    %257 = vmatprep.subr.mxu0 0.0
    %258 = vmatpush1.msra.mxu0 0.0
    %259 = vmatprep.subr.mxu0 0.0
    %260 = vmatpush1.msra.mxu0 0.0
    %261 = vmatprep.subr.mxu0 0.0
    %262 = vmatpush1.msra.mxu0 0.0
    %263 = vmatprep.subr.mxu0 0.0
    %264 = vmatpush1.msra.mxu0 0.0
    %265 = vmatprep.subr.mxu0 0.0
    %266 = vmatpush1.msra.mxu0 0.0
    %267 = vmatprep.subr.mxu0 0.0
    %268 = vmatpush1.msra.mxu0 0.0
    %269 = vmatprep.subr.mxu0 0.0
    %270 = vmatpush1.msra.mxu0 0.0
    %271 = vmatprep.subr.mxu0 0.0
    %272 = vmatpush1.msra.mxu0 0.0
    %273 = vmatprep.subr.mxu0 0.0
    %274 = vmatpush1.msra.mxu0 0.0
    %275 = vmatprep.subr.mxu0 0.0
    %276 = vmatpush1.msra.mxu0 0.0
    %277 = vmatprep.subr.mxu0 0.0
    %278 = vmatpush1.msra.mxu0 0.0
    %279 = vmatprep.subr.mxu0 0.0
    %280 = vmatpush1.msra.mxu0 0.0
    %281 = vmatprep.subr.mxu0 0.0
    %282 = vmatpush1.msra.mxu0 0.0
    %283 = vmatprep.subr.mxu0 0.0
    %284 = vmatpush1.msra.mxu0 0.0
    %285 = vmatprep.subr.mxu0 0.0
    %286 = vmatpush1.msra.mxu0 0.0
    %287 = vmatprep.subr.mxu0 0.0
    %288 = vmatpush1.msra.mxu0 0.0
    %289 = vmatprep.subr.mxu0 0.0
    %290 = vmatpush1.msra.mxu0 0.0
    %291 = vmatprep.subr.mxu0 0.0
    %292 = vmatpush1.msra.mxu0 0.0
    %293 = vmatprep.subr.mxu0 0.0
    %294 = vmatpush1.msra.mxu0 0.0
    %295 = vmatprep.subr.mxu0 0.0
    %296 = vmatpush1.msra.mxu0 0.0
    %297 = vmatprep.subr.mxu0 0.0
    %298 = vmatpush1.msra.mxu0 0.0
    %299 = vmatprep.subr.mxu0 0.0
    %300 = vmatpush1.msra.mxu0 0.0
    %301 = vmatprep.subr.mxu0 0.0
    %302 = vmatpush1.msra.mxu0 0.0
    %303 = vmatprep.subr.mxu0 0.0
    %304 = vmatpush1.msra.mxu0 0.0
    %305 = vmatprep.subr.mxu0 0.0
    %306 = vmatpush1.msra.mxu0 0.0
    %307 = vmatprep.subr.mxu0 0.0
    %308 = vmatpush1.msra.mxu0 0.0
    %309 = vmatprep.subr.mxu0 0.0
    %310 = vmatpush1.msra.mxu0 0.0
    %311 = vmatprep.subr.mxu0 0.0
    %312 = vmatpush1.msra.mxu0 0.0
    %313 = vmatprep.subr.mxu0 0.0
    %314 = vmatpush1.msra.mxu0 0.0
    %315 = vmatprep.subr.mxu0 0.0
    %316 = vmatpush1.msra.mxu0 0.0
    %317 = vmatprep.mubr.f32.mxu0 0.0
    %v318 = vand.u32 %v32, 4294901760
    %v319 = vsub.f32 %v32, %v318
    %320 = vmatmul.mubr.f32.gmra.mrb[0].mxu0 %v319
    %v321 = vpop.f32.mrb[0].mxu0
    %v322 = vadd.f32 %v228, %v321
    %v323 = vpop.f32.mrb[0].mxu0
    %324 = vmatprep.mubr.f32.mxu0 0.0
    %v325 = vand.u32 %v35, 4294901760
    %v326 = vsub.f32 %v35, %v325
    %327 = vmatmul.mubr.f32.gmra.mrb[0].mxu0 %v326
    %v328 = vpop.f32.mrb[0].mxu0
    %v329 = vadd.f32 %v234, %v328
    %v330 = vpop.f32.mrb[0].mxu0
    %331 = vmatprep.mubr.f32.mxu0 0.0
    %v332 = vand.u32 %v38, 4294901760
    %v333 = vsub.f32 %v38, %v332
    %334 = vmatmul.mubr.f32.gmra.mrb[0].mxu0 %v333
    %v335 = vpop.f32.mrb[0].mxu0
    %v336 = vadd.f32 %v240, %v335
    %v337 = vpop.f32.mrb[0].mxu0
    %338 = vmatprep.mubr.f32.mxu0 0.0
    %v339 = vand.u32 %v41, 4294901760
    %v340 = vsub.f32 %v41, %v339
    %341 = vmatmul.mubr.f32.gmra.mrb[0].mxu0 %v340
    %v342 = vpop.f32.mrb[0].mxu0
    %v343 = vadd.f32 %v246, %v342
    %v344 = vpop.f32.mrb[0].mxu0
    %345 = vdwg.mxu0
    %346 = vmatprep.subr.mxu0 0.0
    %v347 = vand.u32 %v28, 4294901760
    %348 = vmatpush1.msra.mxu0 %v347
    %349 = vmatprep.subr.mxu0 0.0
    %v350 = vand.u32 %v29, 4294901760
    %351 = vmatpush1.msra.mxu0 %v350
    %352 = vmatprep.subr.mxu0 0.0
    %353 = vmatpush1.msra.mxu0 0.0
    %354 = vmatprep.subr.mxu0 0.0
    %355 = vmatpush1.msra.mxu0 0.0
    %356 = vmatprep.subr.mxu0 0.0
    %357 = vmatpush1.msra.mxu0 0.0
    %358 = vmatprep.subr.mxu0 0.0
    %359 = vmatpush1.msra.mxu0 0.0
    %360 = vmatprep.subr.mxu0 0.0
    %361 = vmatpush1.msra.mxu0 0.0
    %362 = vmatprep.subr.mxu0 0.0
    %363 = vmatpush1.msra.mxu0 0.0
    %364 = vmatprep.subr.mxu0 0.0
    %365 = vmatpush1.msra.mxu0 0.0
    %366 = vmatprep.subr.mxu0 0.0
    %367 = vmatpush1.msra.mxu0 0.0
    %368 = vmatprep.subr.mxu0 0.0
    %369 = vmatpush1.msra.mxu0 0.0
    %370 = vmatprep.subr.mxu0 0.0
    %371 = vmatpush1.msra.mxu0 0.0
    %372 = vmatprep.subr.mxu0 0.0
    %373 = vmatpush1.msra.mxu0 0.0
    %374 = vmatprep.subr.mxu0 0.0
    %375 = vmatpush1.msra.mxu0 0.0
    %376 = vmatprep.subr.mxu0 0.0
    %377 = vmatpush1.msra.mxu0 0.0
    %378 = vmatprep.subr.mxu0 0.0
    %379 = vmatpush1.msra.mxu0 0.0
    %380 = vmatprep.subr.mxu0 0.0
    %381 = vmatpush1.msra.mxu0 0.0
    %382 = vmatprep.subr.mxu0 0.0
    %383 = vmatpush1.msra.mxu0 0.0
    %384 = vmatprep.subr.mxu0 0.0
    %385 = vmatpush1.msra.mxu0 0.0
    %386 = vmatprep.subr.mxu0 0.0
    %387 = vmatpush1.msra.mxu0 0.0
    %388 = vmatprep.subr.mxu0 0.0
    %389 = vmatpush1.msra.mxu0 0.0
    %390 = vmatprep.subr.mxu0 0.0
    %391 = vmatpush1.msra.mxu0 0.0
    %392 = vmatprep.subr.mxu0 0.0
    %393 = vmatpush1.msra.mxu0 0.0
    %394 = vmatprep.subr.mxu0 0.0
    %395 = vmatpush1.msra.mxu0 0.0
    %396 = vmatprep.subr.mxu0 0.0
    %397 = vmatpush1.msra.mxu0 0.0
    %398 = vmatprep.subr.mxu0 0.0
    %399 = vmatpush1.msra.mxu0 0.0
    %400 = vmatprep.subr.mxu0 0.0
    %401 = vmatpush1.msra.mxu0 0.0
    %402 = vmatprep.subr.mxu0 0.0
    %403 = vmatpush1.msra.mxu0 0.0
    %404 = vmatprep.subr.mxu0 0.0
    %405 = vmatpush1.msra.mxu0 0.0
    %406 = vmatprep.subr.mxu0 0.0
    %407 = vmatpush1.msra.mxu0 0.0
    %408 = vmatprep.subr.mxu0 0.0
    %409 = vmatpush1.msra.mxu0 0.0
    %410 = vmatprep.subr.mxu0 0.0
    %411 = vmatpush1.msra.mxu0 0.0
    %412 = vmatprep.mubr.f32.mxu0 0.0
    %v413 = vand.u32 %v32, 4294901760
    %v414 = vsub.f32 %v32, %v413
    %v415 = vand.u32 %v414, 4294901760
    %416 = vmatmul.mubr.f32.gmra.mrb[0].mxu0 %v415
    %v417 = vpop.f32.mrb[0].mxu0
    %v418 = vadd.f32 %v322, %v417
    %v419 = vpop.f32.mrb[0].mxu0
    %420 = vmatprep.mubr.f32.mxu0 0.0
    %v421 = vand.u32 %v35, 4294901760
    %v422 = vsub.f32 %v35, %v421
    %v423 = vand.u32 %v422, 4294901760
    %424 = vmatmul.mubr.f32.gmra.mrb[0].mxu0 %v423
    %v425 = vpop.f32.mrb[0].mxu0
    %v426 = vadd.f32 %v329, %v425
    %v427 = vpop.f32.mrb[0].mxu0
    %428 = vmatprep.mubr.f32.mxu0 0.0
    %v429 = vand.u32 %v38, 4294901760
    %v430 = vsub.f32 %v38, %v429
    %v431 = vand.u32 %v430, 4294901760
    %432 = vmatmul.mubr.f32.gmra.mrb[0].mxu0 %v431
    %v433 = vpop.f32.mrb[0].mxu0
    %v434 = vadd.f32 %v336, %v433
    %v435 = vpop.f32.mrb[0].mxu0
    %436 = vmatprep.mubr.f32.mxu0 0.0
    %v437 = vand.u32 %v41, 4294901760
    %v438 = vsub.f32 %v41, %v437
    %v439 = vand.u32 %v438, 4294901760
    %440 = vmatmul.mubr.f32.gmra.mrb[0].mxu0 %v439
    %v441 = vpop.f32.mrb[0].mxu0
    %v442 = vadd.f32 %v343, %v441
    %v443 = vpop.f32.mrb[0].mxu0
    %444 = vdwg.mxu0
    %445 = vmatprep.subr.mxu0 0.0
    %v446 = vand.u32 %v28, 4294901760
    %v447 = vsub.f32 %v28, %v446
    %v448 = vand.u32 %v447, 4294901760
    %449 = vmatpush1.msra.mxu0 %v448
    %450 = vmatprep.subr.mxu0 0.0
    %v451 = vand.u32 %v29, 4294901760
    %v452 = vsub.f32 %v29, %v451
    %v453 = vand.u32 %v452, 4294901760
    %454 = vmatpush1.msra.mxu0 %v453
    %455 = vmatprep.subr.mxu0 0.0
    %456 = vmatpush1.msra.mxu0 0.0
    %457 = vmatprep.subr.mxu0 0.0
    %458 = vmatpush1.msra.mxu0 0.0
    %459 = vmatprep.subr.mxu0 0.0
    %460 = vmatpush1.msra.mxu0 0.0
    %461 = vmatprep.subr.mxu0 0.0
    %462 = vmatpush1.msra.mxu0 0.0
    %463 = vmatprep.subr.mxu0 0.0
    %464 = vmatpush1.msra.mxu0 0.0
    %465 = vmatprep.subr.mxu0 0.0
    %466 = vmatpush1.msra.mxu0 0.0
    %467 = vmatprep.subr.mxu0 0.0
    %468 = vmatpush1.msra.mxu0 0.0
    %469 = vmatprep.subr.mxu0 0.0
    %470 = vmatpush1.msra.mxu0 0.0
    %471 = vmatprep.subr.mxu0 0.0
    %472 = vmatpush1.msra.mxu0 0.0
    %473 = vmatprep.subr.mxu0 0.0
    %474 = vmatpush1.msra.mxu0 0.0
    %475 = vmatprep.subr.mxu0 0.0
    %476 = vmatpush1.msra.mxu0 0.0
    %477 = vmatprep.subr.mxu0 0.0
    %478 = vmatpush1.msra.mxu0 0.0
    %479 = vmatprep.subr.mxu0 0.0
    %480 = vmatpush1.msra.mxu0 0.0
    %481 = vmatprep.subr.mxu0 0.0
    %482 = vmatpush1.msra.mxu0 0.0
    %483 = vmatprep.subr.mxu0 0.0
    %484 = vmatpush1.msra.mxu0 0.0
    %485 = vmatprep.subr.mxu0 0.0
    %486 = vmatpush1.msra.mxu0 0.0
    %487 = vmatprep.subr.mxu0 0.0
    %488 = vmatpush1.msra.mxu0 0.0
    %489 = vmatprep.subr.mxu0 0.0
    %490 = vmatpush1.msra.mxu0 0.0
    %491 = vmatprep.subr.mxu0 0.0
    %492 = vmatpush1.msra.mxu0 0.0
    %493 = vmatprep.subr.mxu0 0.0
    %494 = vmatpush1.msra.mxu0 0.0
    %495 = vmatprep.subr.mxu0 0.0
    %496 = vmatpush1.msra.mxu0 0.0
    %497 = vmatprep.subr.mxu0 0.0
    %498 = vmatpush1.msra.mxu0 0.0
    %499 = vmatprep.subr.mxu0 0.0
    %500 = vmatpush1.msra.mxu0 0.0
    %501 = vmatprep.subr.mxu0 0.0
    %502 = vmatpush1.msra.mxu0 0.0
    %503 = vmatprep.subr.mxu0 0.0
    %504 = vmatpush1.msra.mxu0 0.0
    %505 = vmatprep.subr.mxu0 0.0
    %506 = vmatpush1.msra.mxu0 0.0
    %507 = vmatprep.subr.mxu0 0.0
    %508 = vmatpush1.msra.mxu0 0.0
    %509 = vmatprep.subr.mxu0 0.0
    %510 = vmatpush1.msra.mxu0 0.0
    %511 = vmatprep.subr.mxu0 0.0
    %512 = vmatpush1.msra.mxu0 0.0
    %513 = vmatprep.subr.mxu0 0.0
    %514 = vmatpush1.msra.mxu0 0.0
    %515 = vmatprep.mubr.f32.mxu0 0.0
    %v516 = vand.u32 %v32, 4294901760
    %517 = vmatmul.mubr.f32.gmra.mrb[0].mxu0 %v516
    %v518 = vpop.f32.mrb[0].mxu0
    %v519 = vadd.f32 %v418, %v518
    %v520 = vpop.f32.mrb[0].mxu0
    %521 = vmatprep.mubr.f32.mxu0 0.0
    %v522 = vand.u32 %v35, 4294901760
    %523 = vmatmul.mubr.f32.gmra.mrb[0].mxu0 %v522
    %v524 = vpop.f32.mrb[0].mxu0
    %v525 = vadd.f32 %v426, %v524
    %v526 = vpop.f32.mrb[0].mxu0
    %527 = vmatprep.mubr.f32.mxu0 0.0
    %v528 = vand.u32 %v38, 4294901760
    %529 = vmatmul.mubr.f32.gmra.mrb[0].mxu0 %v528
    %v530 = vpop.f32.mrb[0].mxu0
    %v531 = vadd.f32 %v434, %v530
    %v532 = vpop.f32.mrb[0].mxu0
    %533 = vmatprep.mubr.f32.mxu0 0.0
    %v534 = vand.u32 %v41, 4294901760
    %535 = vmatmul.mubr.f32.gmra.mrb[0].mxu0 %v534
    %v536 = vpop.f32.mrb[0].mxu0
    %v537 = vadd.f32 %v442, %v536
    %v538 = vpop.f32.mrb[0].mxu0
    %539 = vdwg.mxu0
    %540 = vmatprep.subr.mxu0 0.0
    %v541 = vand.u32 %v28, 4294901760
    %542 = vmatpush1.msra.mxu0 %v541
    %543 = vmatprep.subr.mxu0 0.0
    %v544 = vand.u32 %v29, 4294901760
    %545 = vmatpush1.msra.mxu0 %v544
    %546 = vmatprep.subr.mxu0 0.0
    %547 = vmatpush1.msra.mxu0 0.0
    %548 = vmatprep.subr.mxu0 0.0
    %549 = vmatpush1.msra.mxu0 0.0
    %550 = vmatprep.subr.mxu0 0.0
    %551 = vmatpush1.msra.mxu0 0.0
    %552 = vmatprep.subr.mxu0 0.0
    %553 = vmatpush1.msra.mxu0 0.0
    %554 = vmatprep.subr.mxu0 0.0
    %555 = vmatpush1.msra.mxu0 0.0
    %556 = vmatprep.subr.mxu0 0.0
    %557 = vmatpush1.msra.mxu0 0.0
    %558 = vmatprep.subr.mxu0 0.0
    %559 = vmatpush1.msra.mxu0 0.0
    %560 = vmatprep.subr.mxu0 0.0
    %561 = vmatpush1.msra.mxu0 0.0
    %562 = vmatprep.subr.mxu0 0.0
    %563 = vmatpush1.msra.mxu0 0.0
    %564 = vmatprep.subr.mxu0 0.0
    %565 = vmatpush1.msra.mxu0 0.0
    %566 = vmatprep.subr.mxu0 0.0
    %567 = vmatpush1.msra.mxu0 0.0
    %568 = vmatprep.subr.mxu0 0.0
    %569 = vmatpush1.msra.mxu0 0.0
    %570 = vmatprep.subr.mxu0 0.0
    %571 = vmatpush1.msra.mxu0 0.0
    %572 = vmatprep.subr.mxu0 0.0
    %573 = vmatpush1.msra.mxu0 0.0
    %574 = vmatprep.subr.mxu0 0.0
    %575 = vmatpush1.msra.mxu0 0.0
    %576 = vmatprep.subr.mxu0 0.0
    %577 = vmatpush1.msra.mxu0 0.0
    %578 = vmatprep.subr.mxu0 0.0
    %579 = vmatpush1.msra.mxu0 0.0
    %580 = vmatprep.subr.mxu0 0.0
    %581 = vmatpush1.msra.mxu0 0.0
    %582 = vmatprep.subr.mxu0 0.0
    %583 = vmatpush1.msra.mxu0 0.0
    %584 = vmatprep.subr.mxu0 0.0
    %585 = vmatpush1.msra.mxu0 0.0
    %586 = vmatprep.subr.mxu0 0.0
    %587 = vmatpush1.msra.mxu0 0.0
    %588 = vmatprep.subr.mxu0 0.0
    %589 = vmatpush1.msra.mxu0 0.0
    %590 = vmatprep.subr.mxu0 0.0
    %591 = vmatpush1.msra.mxu0 0.0
    %592 = vmatprep.subr.mxu0 0.0
    %593 = vmatpush1.msra.mxu0 0.0
    %594 = vmatprep.subr.mxu0 0.0
    %595 = vmatpush1.msra.mxu0 0.0
    %596 = vmatprep.subr.mxu0 0.0
    %597 = vmatpush1.msra.mxu0 0.0
    %598 = vmatprep.subr.mxu0 0.0
    %599 = vmatpush1.msra.mxu0 0.0
    %600 = vmatprep.subr.mxu0 0.0
    %601 = vmatpush1.msra.mxu0 0.0
    %602 = vmatprep.subr.mxu0 0.0
    %603 = vmatpush1.msra.mxu0 0.0
    %604 = vmatprep.subr.mxu0 0.0
    %605 = vmatpush1.msra.mxu0 0.0
    %606 = vmatprep.mubr.f32.mxu0 0.0
    %v607 = vand.u32 %v32, 4294901760
    %608 = vmatmul.mubr.f32.gmra.mrb[0].mxu0 %v607
    %v609 = vpop.f32.mrb[0].mxu0
    %v610 = vadd.f32 %v519, %v609
    %v611 = vpop.f32.mrb[0].mxu0
    %612 = vmatprep.mubr.f32.mxu0 0.0
    %v613 = vand.u32 %v35, 4294901760
    %614 = vmatmul.mubr.f32.gmra.mrb[0].mxu0 %v613
    %v615 = vpop.f32.mrb[0].mxu0
    %v616 = vadd.f32 %v525, %v615
    %v617 = vpop.f32.mrb[0].mxu0
    %618 = vmatprep.mubr.f32.mxu0 0.0
    %v619 = vand.u32 %v38, 4294901760
    %620 = vmatmul.mubr.f32.gmra.mrb[0].mxu0 %v619
    %v621 = vpop.f32.mrb[0].mxu0
    %v622 = vadd.f32 %v531, %v621
    %v623 = vpop.f32.mrb[0].mxu0
    %624 = vmatprep.mubr.f32.mxu0 0.0
    %v625 = vand.u32 %v41, 4294901760
    %626 = vmatmul.mubr.f32.gmra.mrb[0].mxu0 %v625
    %v627 = vpop.f32.mrb[0].mxu0
    %v628 = vadd.f32 %v537, %v627
    %v629 = vpop.f32.mrb[0].mxu0
    %630 = vdwg.mxu0
    %631 = vst [vmem:[#allocation2] sm:$0xff] %v610
    %632 = vst [vmem:[#allocation2 + $0x8] sm:$0xff] %v616
    %633 = vst [vmem:[#allocation2 + $0x10] sm:$0xff] %v622
    %634 = vst [vmem:[#allocation2 + $0x18] sm:$0xff] %v628
    // Predicated region
    $region10: #{tpu_custom_call.1} parent=1 // pred_check
      _
    $region11: #{tpu_custom_call.1} parent=1 // pred_check_branch
      %636 = sbr.rel (0) target = $region13
    $region12: #{tpu_custom_call.1} parent=1 // pred_region
      %s638 = ssub.s32 512, 512
      %639 = vsyncadd [#allocation3], %s638
      %s640 = sshll.u32 [#allocation2], 4
      %s641 = int_to_ptr.vmem [resolvable:$true] %s640
      %646 = dma.vmem_to_hbm [thread:$0]  %s641, 512, %s2, [#allocation3], 128, 128, 8
    $region13: #{tpu_custom_call.1} parent=1 // pred_fallthru
      _
    // Predicated region
    $region14: #{tpu_custom_call.1} parent=1 // pred_check
      _
    $region15: #{tpu_custom_call.1} parent=1 // pred_check_branch
      %648 = sbr.rel (0) target = $region17
    $region16: #{tpu_custom_call.1} parent=1 // pred_region
      %649 = dma.done [#allocation3], 512
    $region17: #{tpu_custom_call.1} parent=1 // pred_fallthru
      _
    %650 = vsyncpa [#allocation3], 1

</llo_original>
